<compile_context>
chip_gen: v5e
topology: v5e:2x2
jax: 0.10.0
libtpu: 0.0.40
codegen_flags: <defaults>
</compile_context>

<pallas_src>
import jax
import jax.numpy as jnp
from jax.experimental import pallas as pl
from jax.experimental.pallas import tpu as pltpu


def _mulshift_kernel(scale_ref, bias_ref, x_ref, o_ref):
    # scale_ref / bias_ref: (Rb, 1) float32 VMEM blocks with 2**(-fl) already folded in.
    # x_ref / o_ref: (Rb, Lb) lane-dense tiles of the flattened (N*C, L_pad) view.
    # Single fused multiply-add per element, computed in f32, cast on the store.
    x = x_ref[...].astype(jnp.float32)
    o_ref[...] = (x * scale_ref[...] + bias_ref[...]).astype(o_ref.dtype)


def _round_up(v: int, m: int) -> int:
    return ((v + m - 1) // m) * m


def mulshift(x: jax.Array, scale, bias, fl: float = 0.0) -> jax.Array:
    """out = (x * scale[None,:,None,None] + bias[None,:,None,None]) * 2**(-fl)

    x: (N, C, H, W); scale, bias: scalar or (C,); fl: static python float.
    """
    N, C, H, W = x.shape
    shift = float(2.0 ** (-fl))

    # Fold the static shift into per-channel scale/bias, always in float32 (avoids
    # double-rounding in low precision and truncation for integer inputs).
    scale_c = jnp.broadcast_to(jnp.asarray(scale, dtype=jnp.float32), (C,)) * shift
    bias_c = jnp.broadcast_to(jnp.asarray(bias, dtype=jnp.float32), (C,)) * shift
    row_scale = jnp.broadcast_to(scale_c[None, :], (N, C)).reshape(N * C, 1)
    row_bias = jnp.broadcast_to(bias_c[None, :], (N, C)).reshape(N * C, 1)

    # Lane-dense flatten; pad lanes to a multiple of 128 for unmasked stores.
    R, L = N * C, H * W
    xf = x.reshape(R, L)
    L_pad = _round_up(L, 128)
    if L_pad != L:
        xf = jnp.pad(xf, ((0, 0), (0, L_pad - L)))

    itemsize = jnp.dtype(x.dtype).itemsize
    # dtype-aware sublane alignment: 8 rows f32, 16 rows bf16, 32 rows int8/fp8.
    sub_align = max(8, 32 // max(1, itemsize))

    TARGET_TILE_BYTES = 4 * 1024 * 1024   # ~4 MiB/tile; ~16 MiB with in/out double buffers
    MIN_ROW_STEPS = 4                     # keep >=4 row blocks when possible (v7x megacore)

    # Prefer whole rows (fully contiguous HBM DMA); split the lane axis only if a single
    # sub_align-row slab would exceed the tile budget.
    if L_pad * sub_align * itemsize <= TARGET_TILE_BYTES:
        block_l = L_pad
    else:
        block_l = max(128, (TARGET_TILE_BYTES // (sub_align * itemsize)) // 128 * 128)
        block_l = min(block_l, L_pad)

    rows_fit = max(sub_align, TARGET_TILE_BYTES // (block_l * itemsize))
    rows_cap = max(1, pl.cdiv(R, MIN_ROW_STEPS))
    block_r = min(rows_fit, rows_cap, R)
    if block_r < R:
        block_r = max(sub_align, (block_r // sub_align) * sub_align)
        block_r = min(block_r, R)
    # block_r is now either == R (full extent) or a multiple of sub_align (>= 8):
    # legal under the (8,128) rule; partial trailing blocks are masked by Pallas.

    grid = (pl.cdiv(R, block_r), pl.cdiv(L_pad, block_l))

    # Explicit VMEM budget: double-buffered x tile + out tile + lane-padded scale/bias.
    tile_bytes = block_r * block_l * itemsize
    sb_bytes = block_r * 128 * 4
    vmem_needed = 2 * (2 * tile_bytes) + 2 * (2 * sb_bytes)
    vmem_limit = int(min(48 * 1024 * 1024,
                         max(vmem_needed + (2 << 20), 16 * 1024 * 1024)))

    out_flat = pl.pallas_call(
        _mulshift_kernel,
        out_shape=jax.ShapeDtypeStruct((R, L_pad), x.dtype),
        grid_spec=pltpu.PrefetchScalarGridSpec(
            num_scalar_prefetch=0,
            grid=grid,
            in_specs=[
                pl.BlockSpec((block_r, 1), lambda i, j: (i, 0)),          # scale rows
                pl.BlockSpec((block_r, 1), lambda i, j: (i, 0)),          # bias rows
                pl.BlockSpec((block_r, block_l), lambda i, j: (i, j)),    # x tile
            ],
            out_specs=pl.BlockSpec((block_r, block_l), lambda i, j: (i, j)),
        ),
        compiler_params=pltpu.CompilerParams(
            dimension_semantics=("parallel", "parallel"),
            vmem_limit_bytes=vmem_limit,
        ),
        cost_estimate=pl.CostEstimate(
            flops=2 * R * L_pad,
            transcendentals=0,
            bytes_accessed=2 * R * L_pad * itemsize + 2 * R * 4,
        ),
    )(row_scale, row_bias, xf)

    if L_pad != L:
        out_flat = out_flat[:, :L]
    return out_flat.reshape(N, C, H, W)


if __name__ == "__main__":
    key = jax.random.PRNGKey(0)
    N, C, H, W = 2, 4, 16, 16

    x = jax.random.normal(key, (N, C, H, W), dtype=jnp.float32)

    # __init__ registers scalar buffers scale=1.0, bias=0.0; the forward indexes them
    # per-channel as [None, :, None, None], so we exercise non-trivial (C,) values.
    scale = 1.0 + 0.1 * jnp.arange(C, dtype=jnp.float32)   # [1.0, 1.1, 1.2, 1.3]
    bias = 0.01 * jnp.arange(C, dtype=jnp.float32)          # [0.0, 0.01, 0.02, 0.03]
    fl = 1.0                                                 # static shift exponent

    out = jax.block_until_ready(mulshift(x, scale, bias, fl))

    # Pure-JAX reference check.
    ref = (x * scale[None, :, None, None] + bias[None, :, None, None]) * (2.0 ** (-fl))
    assert out.shape == (N, C, H, W)
    assert jnp.allclose(out, ref, atol=1e-6, rtol=1e-6)

    print("KERNEL_OK")
</pallas_src>

<mosaic_0001>
module attributes {stable_mosaic.version = 11 : i64} {
  func.func @_mulshift_kernel(%arg0: i32, %arg1: i32, %arg2: memref<8x1xf32, #tpu.memory_space<vmem>>, %arg3: memref<8x1xf32, #tpu.memory_space<vmem>>, %arg4: memref<8x256xf32, #tpu.memory_space<vmem>>, %arg5: memref<8x256xf32, #tpu.memory_space<vmem>>) attributes {dimension_semantics = [#tpu.dimension_semantics<parallel>, #tpu.dimension_semantics<parallel>], iteration_bounds = array<i64: 1, 1>, scalar_prefetch = 0 : i64, scratch_operands = 0 : i64, tpu.core_type = #tpu.core_type<tc>, window_params = [{transform_indices = @transform_0, window_bounds = array<i64: 8, 1>}, {transform_indices = @transform_1, window_bounds = array<i64: 8, 1>}, {transform_indices = @transform_2, window_bounds = array<i64: 8, 256>}, {transform_indices = @transform_3, window_bounds = array<i64: 8, 256>}]} {
    %c0 = arith.constant 0 : index
    %c0_0 = arith.constant 0 : index
    %0 = vector.load %arg4[%c0, %c0_0] : memref<8x256xf32, #tpu.memory_space<vmem>>, vector<8x256xf32>
    %c0_1 = arith.constant 0 : index
    %c0_2 = arith.constant 0 : index
    %1 = vector.load %arg2[%c0_1, %c0_2] : memref<8x1xf32, #tpu.memory_space<vmem>>, vector<8x1xf32>
    %2 = vector.broadcast %1 : vector<8x1xf32> to vector<8x256xf32>
    %3 = arith.mulf %0, %2 : vector<8x256xf32>
    %c0_3 = arith.constant 0 : index
    %c0_4 = arith.constant 0 : index
    %4 = vector.load %arg3[%c0_3, %c0_4] : memref<8x1xf32, #tpu.memory_space<vmem>>, vector<8x1xf32>
    %5 = vector.broadcast %4 : vector<8x1xf32> to vector<8x256xf32>
    %6 = arith.addf %3, %5 : vector<8x256xf32>
    %c0_5 = arith.constant 0 : index
    %c0_6 = arith.constant 0 : index
    %7 = vector.load %arg5[%c0_5, %c0_6] : memref<8x256xf32, #tpu.memory_space<vmem>>, vector<8x256xf32>
    tpu.vector_store %arg5[%c0_5, %c0_6], %6 {strides = array<i32>} : memref<8x256xf32, #tpu.memory_space<vmem>>, vector<8x256xf32>,
    return
  }
  func.func @transform_0(%arg0: i32, %arg1: i32) -> (i32, i32) {
    %c0_i32 = arith.constant 0 : i32
    %c0_i32_0 = arith.constant 0 : i32
    return %arg0, %c0_i32 : i32, i32
  }
  func.func @transform_1(%arg0: i32, %arg1: i32) -> (i32, i32) {
    %c0_i32 = arith.constant 0 : i32
    %c0_i32_0 = arith.constant 0 : i32
    return %arg0, %c0_i32 : i32, i32
  }
  func.func @transform_2(%arg0: i32, %arg1: i32) -> (i32, i32) {
    %c0_i32 = arith.constant 0 : i32
    return %arg0, %arg1 : i32, i32
  }
  func.func @transform_3(%arg0: i32, %arg1: i32) -> (i32, i32) {
    %c0_i32 = arith.constant 0 : i32
    return %arg0, %arg1 : i32, i32
  }
}

</mosaic_0001>

<llo_original>
// kernel: tpu_custom_call.1
$region0: #{tpu_custom_call.1}
  #allocation0 [shape = 'u32[]', space=smem, size = 0x4, offset = 0x4, fixed_abs, tag = 'smem constant byte address 0x4 - core index']
  #allocation1 [shape = 'u32[72,128]{1,0:T(1,128)}', space=vmem, size = 0x9000, scoped, tag = 'internal scratch']
  %s0 = inlined_call_operand.vmem [shape: f32[8,1], index: 0, kind: input, shape index: {}]
  %s1 = inlined_call_operand.vmem [shape: f32[8,1], index: 1, kind: input, shape index: {}]
  %s2 = inlined_call_operand.vmem [shape: f32[8,256], index: 2, kind: input, shape index: {}]
  %s3 = inlined_call_operand.hbm [shape: f32[8,256], index: 3, kind: output, shape index: {}]
  %s4 = sld [smem:[#allocation0]]
  $region22: #{tpu_custom_call.1} parent=0
    _
  %s6 = ssub.s32 1, %s4
  %s7 = scalar_select 0, %s6, %s4
  $region1: #{tpu_custom_call.1} parent=0
    #allocation2 [shape = 'u8[8192]{0}', space=vmem, size = 0x2000, scoped, tag = 'output window, operand 0, single buffered']
    #allocation3 [shape = 's32[1]{0}', space=sflag, size = 0x4, scoped, tag = 'scoped memory for tpu_custom_call.1']
    %8 = vsyncpa [#allocation3], 0
    // Predicated region
    $region2: #{tpu_custom_call.1} parent=1 // pred_check
      _
    $region3: #{tpu_custom_call.1} parent=1 // pred_check_branch
      %10 = sbr.rel (0) target = $region5
    $region4: #{tpu_custom_call.1} parent=1 // pred_region
      _
    $region5: #{tpu_custom_call.1} parent=1 // pred_fallthru
      _
    // Predicated region
    $region6: #{tpu_custom_call.1} parent=1 // pred_check
      _
    $region7: #{tpu_custom_call.1} parent=1 // pred_check_branch
      %12 = sbr.rel (0) target = $region9
    $region8: #{tpu_custom_call.1} parent=1 // pred_region
      _
    $region9: #{tpu_custom_call.1} parent=1 // pred_fallthru
      _
    // Predicated region
    $region10: #{tpu_custom_call.1} parent=1 // pred_check
      _
    $region11: #{tpu_custom_call.1} parent=1 // pred_check_branch
      %14 = sbr.rel (0) target = $region13
    $region12: #{tpu_custom_call.1} parent=1 // pred_region
      _
    $region13: #{tpu_custom_call.1} parent=1 // pred_fallthru
      _
    %v15 = vld [vmem:[%s2] sm:$0xff]
    %v16 = vld [vmem:[%s2 + $0x8] sm:$0xff]
    %v17 = vld [vmem:[%s0] sm:$0xff]
    %19 = vset.pattern.permute.xlu0 0
    %20 = vperm.xlu0 %19, %v17
    %v21 = vpop.permute.xlu0 %20
    %v23 = vmul.f32 %v15, %v21
    %v24 = vmul.f32 %v16, %v21
    %v25 = vld [vmem:[%s1] sm:$0xff]
    %27 = vset.pattern.permute.xlu0 0
    %28 = vperm.xlu0 %27, %v25
    %v29 = vpop.permute.xlu0 %28
    %v31 = vadd.f32 %v23, %v29
    %v32 = vadd.f32 %v24, %v29
    %33 = vst [vmem:[#allocation2] sm:$0xff] %v31
    %34 = vst [vmem:[#allocation2 + $0x8] sm:$0xff] %v32
    // Predicated region
    $region14: #{tpu_custom_call.1} parent=1 // pred_check
      _
    $region15: #{tpu_custom_call.1} parent=1 // pred_check_branch
      %36 = sbr.rel (0) target = $region17
    $region16: #{tpu_custom_call.1} parent=1 // pred_region
      %38 = vsyncadd [#allocation3], 0
      %s40 = sshll.u32 [#allocation2], 4
      %s41 = int_to_ptr.vmem [resolvable:$true] %s40
      %s42 = sshll.u32 %s3, 4
      %s43 = int_to_ptr.hbm [resolvable:$true] %s42
      %45 = dma.vmem_to_hbm [thread:$0]  %s41, 256, %s43, [#allocation3]
    $region17: #{tpu_custom_call.1} parent=1 // pred_fallthru
      _
    // Predicated region
    $region18: #{tpu_custom_call.1} parent=1 // pred_check
      _
    $region19: #{tpu_custom_call.1} parent=1 // pred_check_branch
      %47 = sbr.rel (0) target = $region21
    $region20: #{tpu_custom_call.1} parent=1 // pred_region
      %49 = dma.done [#allocation3], 256
    $region21: #{tpu_custom_call.1} parent=1 // pred_fallthru
      _
    %50 = vsyncpa [#allocation3], 1

</llo_original>
